<compile_context>
chip_gen: v7x
topology: tpu7x:2x2x1
jax: 0.10.0
libtpu: 0.0.40
codegen_flags: <defaults>
</compile_context>

<pallas_src>
import functools

import jax
import jax.numpy as jnp
import numpy as np
from jax import lax
from jax.experimental import pallas as pl
from jax.experimental.pallas import tpu as pltpu


def _round_up(x, m):
    return (x + m - 1) // m * m


def _ghost_kernel(W, K, HW, Mv, x_ref, wpw_ref, cp_ref, out_ref, scr_ref):
    pad = K // 2
    KK = K * K
    HWr = x_ref.shape[2]            # flattened spatial, rounded up to 128 lanes
    TC = scr_ref.shape[0]           # channel tile (sublanes)
    scr_w = scr_ref.shape[1]        # Mv + HWr + Mv

    # Zero only the small left halo (cheap (TC, Mv) store). Re-done every grid
    # step so correctness holds when the grid is sharded across TensorCores.
    if Mv > 0:
        scr_ref[:, :Mv] = jnp.zeros((TC, Mv), jnp.float32)

    # Per-channel params, one dense lane-minor tile:
    #   columns [0..KK-1] = BN-folded depthwise taps,
    #   column KK = depthwise bias, column KK+1 = pointwise bias.
    cp = cp_ref[...]
    pw_bias = cp[:, KK + 1][:, None]

    # Pointwise 1x1 conv (+ folded BN scale/bias) + ReLU on the MXU.
    pw = jnp.maximum(
        jnp.dot(wpw_ref[...], x_ref[0], preferred_element_type=jnp.float32)
        + pw_bias, 0.0)

    out_ref[0, 1] = pw.astype(out_ref.dtype)          # identity branch of cat
    scr_ref[:, Mv:Mv + HWr] = pw                      # lane-aligned (Mv%128==0)
    # Right halo + lane-alignment tail are zeroed AFTER the pw store so any
    # relu(bias) garbage in padded tail lanes is cleared before taps read it.
    if scr_w - (Mv + HW) > 0:
        scr_ref[:, Mv + HW:] = jnp.zeros((TC, scr_w - (Mv + HW)), jnp.float32)

    # Depthwise KxK conv, stride 1.
    dw_bias = cp[:, KK][:, None]

    def wk(kh, kw):
        return cp[:, kh * K + kw][:, None]            # (TC, 1)

    # Center column (kw == pad): center tap reused from registers, bias folded.
    acc = pw * wk(pad, pad) + dw_bias
    for kh in range(K):
        if kh == pad:
            continue
        off = Mv + (kh - pad) * W
        acc = acc + scr_ref[:, off:off + HWr] * wk(kh, pad)

    # Off-center columns: the flat (no W-pad) layout wraps rows on horizontal
    # shifts, so each kw != pad gets one iota column mask (K-1 masks total),
    # applied once per column group (not per tap).
    col = lax.broadcasted_iota(jnp.int32, (1, HWr), 1) % W
    for kw in range(K):
        s = kw - pad
        if s == 0:
            continue
        part = None
        for kh in range(K):
            off = Mv + (kh - pad) * W + s
            tap = scr_ref[:, off:off + HWr] * wk(kh, kw)
            part = tap if part is None else part + tap
        mask = (col + s >= 0) & (col + s < W)
        acc = acc + jnp.where(mask, part, 0.0)

    out_ref[0, 0] = acc.astype(out_ref.dtype)         # ghost (depthwise) branch


def _pick_channel_tile(c, max_tile=128):
    # TODO(synk): raise to 256 on v6e/v7x (2x256x256 MXU) when Cmid >= 256.
    if c <= max_tile:
        return c
    for t in range(max_tile, 7, -8):                  # 128, 120, ..., 8
        if c % t == 0:
            return t
    return c                                          # fallback: whole Cmid


def _vmem_limit_bytes(default=32 * 1024 * 1024):
    # Generation-aware VMEM budget (~55% of physical: ~70 MiB on v5e/v6e,
    # ~35 MiB on v7x). Falls back to a conservative default if the query fails.
    try:
        cap = getattr(pltpu.get_tpu_info(), "vmem_capacity_bytes", None)
        if cap:
            return int(cap * 0.55)
    except Exception:
        pass
    return default


def ghost_block(x_nchw, params, kernel_size=3):
    wpw, pw_scale, pw_bias, wdw, dw_scale, dw_bias = params
    N, Cin, H, W = x_nchw.shape
    Cmid = wpw.shape[1]
    K = kernel_size
    pad = K // 2
    HW = H * W
    HWr = _round_up(HW, 128)                 # lane-dense output stores / DMA
    Mv = _round_up(pad * W + pad, 128)       # 128-aligned halo margin

    # Flatten spatial (free, contiguous reshape). Only pad when HW is not a
    # multiple of 128 (example shapes: no copy at all).
    x_flat = x_nchw.reshape(N, Cin, HW)
    if HWr != HW:
        x_flat = jnp.pad(x_flat, ((0, 0), (0, 0), (0, HWr - HW)))

    # Fold BatchNorm (inference) into weights/biases, outside the kernel.
    # bf16 x / weights are supported for bandwidth (accumulation stays f32).
    w_pw_eff = (wpw.T * pw_scale[:, None]).astype(x_nchw.dtype)      # (Cmid, Cin)
    w_dw_eff = (wdw * dw_scale[None, :]).T                           # (Cmid, K*K)
    chan_params = jnp.concatenate(
        [w_dw_eff, dw_bias[:, None], pw_bias[:, None]],
        axis=1).astype(jnp.float32)                                  # (Cmid, KK+2)

    TC = _pick_channel_tile(Cmid)
    n_ct = Cmid // TC

    out = pl.pallas_call(
        functools.partial(_ghost_kernel, W, K, HW, Mv),
        out_shape=jax.ShapeDtypeStruct((N, 2, Cmid, HWr), x_nchw.dtype),
        grid_spec=pltpu.PrefetchScalarGridSpec(
            num_scalar_prefetch=0,
            grid=(N, n_ct),
            in_specs=[
                pl.BlockSpec((1, Cin, HWr), lambda n, c: (n, 0, 0)),
                pl.BlockSpec((TC, Cin), lambda n, c: (c, 0)),
                pl.BlockSpec((TC, K * K + 2), lambda n, c: (c, 0)),
            ],
            out_specs=pl.BlockSpec((1, 2, TC, HWr), lambda n, c: (n, 0, c, 0)),
            scratch_shapes=[pltpu.VMEM((TC, Mv + HWr + Mv), jnp.float32)],
        ),
        compiler_params=pltpu.CompilerParams(
            dimension_semantics=("parallel", "parallel"),
            vmem_limit_bytes=_vmem_limit_bytes()),
    )(x_flat, w_pw_eff, chan_params)

    # (N, 2, Cmid, HWr) -> NCHW torch.cat([dw, pw], dim=1). When HW is already
    # a multiple of 128 this is a free contiguous reshape (no crop copy).
    if HWr != HW:
        out = out[..., :HW]   # TODO(synk): fuse this crop into the consumer
    return out.reshape(N, 2 * Cmid, H, W)


def ghost_block_ref(x, params, kernel_size=3):
    """Pure-JAX (XLA conv, HIGHEST precision) reference for correctness."""
    wpw, pw_scale, pw_bias, wdw, dw_scale, dw_bias = params
    Cin, Cmid = wpw.shape
    K = kernel_size
    pad = K // 2
    w_pw = wpw.T.reshape(Cmid, Cin, 1, 1)
    y = lax.conv_general_dilated(x, w_pw, (1, 1), "VALID",
                                 dimension_numbers=("NCHW", "OIHW", "NCHW"),
                                 precision=lax.Precision.HIGHEST)
    y = y * pw_scale.reshape(1, -1, 1, 1) + pw_bias.reshape(1, -1, 1, 1)
    y = jnp.maximum(y, 0.0)
    w_dw = wdw.reshape(K, K, Cmid).transpose(2, 0, 1).reshape(Cmid, 1, K, K)
    z = lax.conv_general_dilated(y, w_dw, (1, 1), [(pad, pad), (pad, pad)],
                                 feature_group_count=Cmid,
                                 dimension_numbers=("NCHW", "OIHW", "NCHW"),
                                 precision=lax.Precision.HIGHEST)
    z = z * dw_scale.reshape(1, -1, 1, 1) + dw_bias.reshape(1, -1, 1, 1)
    return jnp.concatenate([z, y], axis=1)


def init_params(key, in_channels, out_channels, kernel_size=3):
    Cmid = out_channels // 2
    K = kernel_size
    ks = jax.random.split(key, 4)
    wpw = 0.3 * jax.random.normal(ks[0], (in_channels, Cmid), jnp.float32)
    wdw = 0.3 * jax.random.normal(ks[1], (K * K, Cmid), jnp.float32)

    def fold_bn(k, C):
        k1, k2, k3, k4 = jax.random.split(k, 4)
        gamma = jax.random.uniform(k1, (C,), minval=0.5, maxval=1.5)
        beta = 0.1 * jax.random.normal(k2, (C,))
        mean = 0.1 * jax.random.normal(k3, (C,))
        var = jax.random.uniform(k4, (C,), minval=0.5, maxval=1.5)
        scale = gamma / jnp.sqrt(var + 1e-5)
        bias = beta - mean * scale
        return scale.astype(jnp.float32), bias.astype(jnp.float32)

    pw_scale, pw_bias = fold_bn(ks[2], Cmid)
    dw_scale, dw_bias = fold_bn(ks[3], Cmid)
    return (wpw, pw_scale, pw_bias, wdw, dw_scale, dw_bias)


if __name__ == "__main__":
    key = jax.random.PRNGKey(0)
    k_param, k_x = jax.random.split(key)
    in_channels, out_channels, K = 4, 8, 3
    x = jax.random.normal(k_x, (2, in_channels, 16, 16), jnp.float32)
    params = init_params(k_param, in_channels, out_channels, K)

    out = jax.block_until_ready(ghost_block(x, params, kernel_size=K))
    ref = jax.block_until_ready(ghost_block_ref(x, params, kernel_size=K))

    assert out.shape == (2, out_channels, 16, 16), out.shape
    # Tolerance accounts for the pointwise matmul running at default MXU
    # precision (bf16-pass) while the reference uses HIGHEST.
    np.testing.assert_allclose(np.asarray(out), np.asarray(ref),
                               rtol=3e-2, atol=3e-2)
    print("KERNEL_OK")
</pallas_src>

<mosaic_0001>
module attributes {stable_mosaic.version = 11 : i64} {
  func.func @_ghost_kernel(%arg0: i32, %arg1: i32, %arg2: memref<1x4x256xf32, #tpu.memory_space<vmem>>, %arg3: memref<4x4xf32, #tpu.memory_space<vmem>>, %arg4: memref<4x11xf32, #tpu.memory_space<vmem>>, %arg5: memref<1x2x4x256xf32, #tpu.memory_space<vmem>>, %arg6: memref<4x512xf32, #tpu.memory_space<vmem>>) attributes {dimension_semantics = [#tpu.dimension_semantics<parallel>, #tpu.dimension_semantics<parallel>], iteration_bounds = array<i64: 2, 1>, scalar_prefetch = 0 : i64, scratch_operands = 1 : i64, tpu.core_type = #tpu.core_type<tc>, window_params = [{transform_indices = @transform_0, window_bounds = array<i64: 1, 4, 256>}, {transform_indices = @transform_1, window_bounds = array<i64: 4, 4>}, {transform_indices = @transform_2, window_bounds = array<i64: 4, 11>}, {transform_indices = @transform_3, window_bounds = array<i64: 1, 2, 4, 256>}]} {
    %cst = arith.constant 0.000000e+00 : f32
    %0 = vector.broadcast %cst : f32 to vector<4x128xf32>
    %c0 = arith.constant 0 : index
    %c0_0 = arith.constant 0 : index
    %1 = vector.load %arg6[%c0, %c0_0] : memref<4x512xf32, #tpu.memory_space<vmem>>, vector<4x128xf32>
    tpu.vector_store %arg6[%c0, %c0_0], %0 {strides = array<i32>} : memref<4x512xf32, #tpu.memory_space<vmem>>, vector<4x128xf32>,
    %c0_1 = arith.constant 0 : index
    %c0_2 = arith.constant 0 : index
    %2 = vector.load %arg4[%c0_1, %c0_2] : memref<4x11xf32, #tpu.memory_space<vmem>>, vector<4x11xf32>
    %3 = vector.extract_strided_slice %2 {offsets = [0, 10], sizes = [4, 1], strides = [1, 1]} : vector<4x11xf32> to vector<4x1xf32>
    %4 = vector.shape_cast %3 : vector<4x1xf32> to vector<4xf32>
    %5 = vector.shape_cast %4 : vector<4xf32> to vector<4x1xf32>
    %c0_3 = arith.constant 0 : index
    %c0_4 = arith.constant 0 : index
    %6 = vector.load %arg3[%c0_3, %c0_4] : memref<4x4xf32, #tpu.memory_space<vmem>>, vector<4x4xf32>
    %c0_5 = arith.constant 0 : index
    %c0_6 = arith.constant 0 : index
    %c0_7 = arith.constant 0 : index
    %7 = vector.load %arg2[%c0_5, %c0_6, %c0_7] : memref<1x4x256xf32, #tpu.memory_space<vmem>>, vector<1x4x256xf32>
    %8 = vector.shape_cast %7 : vector<1x4x256xf32> to vector<4x256xf32>
    %cst_8 = arith.constant dense<0.000000e+00> : vector<4x256xf32>
    %9 = tpu.matmul %6, %8, %cst_8 {dimension_numbers = #tpu.dot_dimension_numbers<[1], [0], [0], [1], [0, 0, 1, 1], [], []>} : vector<4x4xf32>, vector<4x256xf32>, vector<4x256xf32> -> vector<4x256xf32>
    %10 = vector.broadcast %5 : vector<4x1xf32> to vector<4x256xf32>
    %11 = arith.addf %9, %10 : vector<4x256xf32>
    %cst_9 = arith.constant 0.000000e+00 : f32
    %12 = vector.broadcast %cst_9 : f32 to vector<4x256xf32>
    %13 = arith.maximumf %11, %12 : vector<4x256xf32>
    %c0_10 = arith.constant 0 : index
    %c1 = arith.constant 1 : index
    %c0_11 = arith.constant 0 : index
    %c0_12 = arith.constant 0 : index
    %14 = vector.load %arg5[%c0_10, %c1, %c0_11, %c0_12] : memref<1x2x4x256xf32, #tpu.memory_space<vmem>>, vector<1x1x4x256xf32>
    %15 = vector.shape_cast %14 : vector<1x1x4x256xf32> to vector<4x256xf32>
    %16 = vector.shape_cast %13 : vector<4x256xf32> to vector<1x1x4x256xf32>
    tpu.vector_store %arg5[%c0_10, %c1, %c0_11, %c0_12], %16 {strides = array<i32>} : memref<1x2x4x256xf32, #tpu.memory_space<vmem>>, vector<1x1x4x256xf32>,
    %c0_13 = arith.constant 0 : index
    %c128 = arith.constant 128 : index
    %17 = vector.load %arg6[%c0_13, %c128] : memref<4x512xf32, #tpu.memory_space<vmem>>, vector<4x256xf32>
    tpu.vector_store %arg6[%c0_13, %c128], %13 {strides = array<i32>} : memref<4x512xf32, #tpu.memory_space<vmem>>, vector<4x256xf32>,
    %cst_14 = arith.constant 0.000000e+00 : f32
    %18 = vector.broadcast %cst_14 : f32 to vector<4x128xf32>
    %c0_15 = arith.constant 0 : index
    %c384 = arith.constant 384 : index
    %19 = vector.load %arg6[%c0_15, %c384] : memref<4x512xf32, #tpu.memory_space<vmem>>, vector<4x128xf32>
    tpu.vector_store %arg6[%c0_15, %c384], %18 {strides = array<i32>} : memref<4x512xf32, #tpu.memory_space<vmem>>, vector<4x128xf32>,
    %20 = vector.extract_strided_slice %2 {offsets = [0, 9], sizes = [4, 1], strides = [1, 1]} : vector<4x11xf32> to vector<4x1xf32>
    %21 = vector.shape_cast %20 : vector<4x1xf32> to vector<4xf32>
    %22 = vector.shape_cast %21 : vector<4xf32> to vector<4x1xf32>
    %23 = vector.extract_strided_slice %2 {offsets = [0, 4], sizes = [4, 1], strides = [1, 1]} : vector<4x11xf32> to vector<4x1xf32>
    %24 = vector.shape_cast %23 : vector<4x1xf32> to vector<4xf32>
    %25 = vector.shape_cast %24 : vector<4xf32> to vector<4x1xf32>
    %26 = vector.broadcast %25 : vector<4x1xf32> to vector<4x256xf32>
    %27 = arith.mulf %13, %26 : vector<4x256xf32>
    %28 = vector.broadcast %22 : vector<4x1xf32> to vector<4x256xf32>
    %29 = arith.addf %27, %28 : vector<4x256xf32>
    %c0_16 = arith.constant 0 : index
    %c112 = arith.constant 112 : index
    %30 = vector.load %arg6[%c0_16, %c112] : memref<4x512xf32, #tpu.memory_space<vmem>>, vector<4x256xf32>
    %31 = vector.extract_strided_slice %2 {offsets = [0, 1], sizes = [4, 1], strides = [1, 1]} : vector<4x11xf32> to vector<4x1xf32>
    %32 = vector.shape_cast %31 : vector<4x1xf32> to vector<4xf32>
    %33 = vector.shape_cast %32 : vector<4xf32> to vector<4x1xf32>
    %34 = vector.broadcast %33 : vector<4x1xf32> to vector<4x256xf32>
    %35 = arith.mulf %30, %34 : vector<4x256xf32>
    %36 = arith.addf %29, %35 : vector<4x256xf32>
    %c0_17 = arith.constant 0 : index
    %c144 = arith.constant 144 : index
    %37 = vector.load %arg6[%c0_17, %c144] : memref<4x512xf32, #tpu.memory_space<vmem>>, vector<4x256xf32>
    %38 = vector.extract_strided_slice %2 {offsets = [0, 7], sizes = [4, 1], strides = [1, 1]} : vector<4x11xf32> to vector<4x1xf32>
    %39 = vector.shape_cast %38 : vector<4x1xf32> to vector<4xf32>
    %40 = vector.shape_cast %39 : vector<4xf32> to vector<4x1xf32>
    %41 = vector.broadcast %40 : vector<4x1xf32> to vector<4x256xf32>
    %42 = arith.mulf %37, %41 : vector<4x256xf32>
    %43 = arith.addf %36, %42 : vector<4x256xf32>
    %44 = tpu.iota {dimensions = array<i32: 1>} : vector<1x256xi32>
    %c16_i32 = arith.constant 16 : i32
    %c0_i32 = arith.constant 0 : i32
    %45 = arith.cmpi eq, %c16_i32, %c0_i32 : i32
    %c1_i32 = arith.constant 1 : i32
    %46 = arith.select %45, %c1_i32, %c16_i32 : i32
    %47 = vector.broadcast %46 : i32 to vector<1x256xi32>
    %48 = arith.remsi %44, %47 : vector<1x256xi32>
    %c0_i32_18 = arith.constant 0 : i32
    %49 = vector.broadcast %c0_i32_18 : i32 to vector<1x256xi32>
    %50 = arith.cmpi ne, %48, %49 : vector<1x256xi32>
    %c0_i32_19 = arith.constant 0 : i32
    %51 = vector.broadcast %c0_i32_19 : i32 to vector<1x256xi32>
    %52 = arith.cmpi slt, %48, %51 : vector<1x256xi32>
    %c0_i32_20 = arith.constant 0 : i32
    %53 = arith.cmpi slt, %46, %c0_i32_20 : i32
    %54 = vector.broadcast %53 : i1 to vector<1x256xi1>
    %55 = vector.broadcast %54 : vector<1x256xi1> to vector<1x256xi1>
    %56 = arith.xori %52, %55 : vector<1x256xi1>
    %57 = arith.andi %56, %50 : vector<1x256xi1>
    %58 = vector.broadcast %46 : i32 to vector<1x256xi32>
    %59 = arith.addi %48, %58 : vector<1x256xi32>
    %60 = arith.select %57, %59, %48 : vector<1x256xi1>, vector<1x256xi32>
    %c0_21 = arith.constant 0 : index
    %c111 = arith.constant 111 : index
    %61 = vector.load %arg6[%c0_21, %c111] : memref<4x512xf32, #tpu.memory_space<vmem>>, vector<4x256xf32>
    %62 = vector.extract_strided_slice %2 {offsets = [0, 0], sizes = [4, 1], strides = [1, 1]} : vector<4x11xf32> to vector<4x1xf32>
    %63 = vector.shape_cast %62 : vector<4x1xf32> to vector<4xf32>
    %64 = vector.shape_cast %63 : vector<4xf32> to vector<4x1xf32>
    %65 = vector.broadcast %64 : vector<4x1xf32> to vector<4x256xf32>
    %66 = arith.mulf %61, %65 : vector<4x256xf32>
    %c0_22 = arith.constant 0 : index
    %c127 = arith.constant 127 : index
    %67 = vector.load %arg6[%c0_22, %c127] : memref<4x512xf32, #tpu.memory_space<vmem>>, vector<4x256xf32>
    %68 = vector.extract_strided_slice %2 {offsets = [0, 3], sizes = [4, 1], strides = [1, 1]} : vector<4x11xf32> to vector<4x1xf32>
    %69 = vector.shape_cast %68 : vector<4x1xf32> to vector<4xf32>
    %70 = vector.shape_cast %69 : vector<4xf32> to vector<4x1xf32>
    %71 = vector.broadcast %70 : vector<4x1xf32> to vector<4x256xf32>
    %72 = arith.mulf %67, %71 : vector<4x256xf32>
    %73 = arith.addf %66, %72 : vector<4x256xf32>
    %c0_23 = arith.constant 0 : index
    %c143 = arith.constant 143 : index
    %74 = vector.load %arg6[%c0_23, %c143] : memref<4x512xf32, #tpu.memory_space<vmem>>, vector<4x256xf32>
    %75 = vector.extract_strided_slice %2 {offsets = [0, 6], sizes = [4, 1], strides = [1, 1]} : vector<4x11xf32> to vector<4x1xf32>
    %76 = vector.shape_cast %75 : vector<4x1xf32> to vector<4xf32>
    %77 = vector.shape_cast %76 : vector<4xf32> to vector<4x1xf32>
    %78 = vector.broadcast %77 : vector<4x1xf32> to vector<4x256xf32>
    %79 = arith.mulf %74, %78 : vector<4x256xf32>
    %80 = arith.addf %73, %79 : vector<4x256xf32>
    %c-1_i32 = arith.constant -1 : i32
    %81 = vector.broadcast %c-1_i32 : i32 to vector<1x256xi32>
    %82 = arith.addi %60, %81 : vector<1x256xi32>
    %c0_i32_24 = arith.constant 0 : i32
    %83 = vector.broadcast %c0_i32_24 : i32 to vector<1x256xi32>
    %84 = arith.cmpi sge, %82, %83 : vector<1x256xi32>
    %c-1_i32_25 = arith.constant -1 : i32
    %85 = vector.broadcast %c-1_i32_25 : i32 to vector<1x256xi32>
    %86 = arith.addi %60, %85 : vector<1x256xi32>
    %c16_i32_26 = arith.constant 16 : i32
    %87 = vector.broadcast %c16_i32_26 : i32 to vector<1x256xi32>
    %88 = arith.cmpi slt, %86, %87 : vector<1x256xi32>
    %89 = arith.andi %84, %88 : vector<1x256xi1>
    %cst_27 = arith.constant 0.000000e+00 : f32
    %90 = vector.shape_cast %89 : vector<1x256xi1> to vector<1x256xi1>
    %91 = vector.broadcast %90 : vector<1x256xi1> to vector<4x256xi1>
    %92 = vector.broadcast %cst_27 : f32 to vector<4x256xf32>
    %93 = arith.select %91, %80, %92 : vector<4x256xi1>, vector<4x256xf32>
    %94 = arith.addf %43, %93 : vector<4x256xf32>
    %c0_28 = arith.constant 0 : index
    %c113 = arith.constant 113 : index
    %95 = vector.load %arg6[%c0_28, %c113] : memref<4x512xf32, #tpu.memory_space<vmem>>, vector<4x256xf32>
    %96 = vector.extract_strided_slice %2 {offsets = [0, 2], sizes = [4, 1], strides = [1, 1]} : vector<4x11xf32> to vector<4x1xf32>
    %97 = vector.shape_cast %96 : vector<4x1xf32> to vector<4xf32>
    %98 = vector.shape_cast %97 : vector<4xf32> to vector<4x1xf32>
    %99 = vector.broadcast %98 : vector<4x1xf32> to vector<4x256xf32>
    %100 = arith.mulf %95, %99 : vector<4x256xf32>
    %c0_29 = arith.constant 0 : index
    %c129 = arith.constant 129 : index
    %101 = vector.load %arg6[%c0_29, %c129] : memref<4x512xf32, #tpu.memory_space<vmem>>, vector<4x256xf32>
    %102 = vector.extract_strided_slice %2 {offsets = [0, 5], sizes = [4, 1], strides = [1, 1]} : vector<4x11xf32> to vector<4x1xf32>
    %103 = vector.shape_cast %102 : vector<4x1xf32> to vector<4xf32>
    %104 = vector.shape_cast %103 : vector<4xf32> to vector<4x1xf32>
    %105 = vector.broadcast %104 : vector<4x1xf32> to vector<4x256xf32>
    %106 = arith.mulf %101, %105 : vector<4x256xf32>
    %107 = arith.addf %100, %106 : vector<4x256xf32>
    %c0_30 = arith.constant 0 : index
    %c145 = arith.constant 145 : index
    %108 = vector.load %arg6[%c0_30, %c145] : memref<4x512xf32, #tpu.memory_space<vmem>>, vector<4x256xf32>
    %109 = vector.extract_strided_slice %2 {offsets = [0, 8], sizes = [4, 1], strides = [1, 1]} : vector<4x11xf32> to vector<4x1xf32>
    %110 = vector.shape_cast %109 : vector<4x1xf32> to vector<4xf32>
    %111 = vector.shape_cast %110 : vector<4xf32> to vector<4x1xf32>
    %112 = vector.broadcast %111 : vector<4x1xf32> to vector<4x256xf32>
    %113 = arith.mulf %108, %112 : vector<4x256xf32>
    %114 = arith.addf %107, %113 : vector<4x256xf32>
    %c1_i32_31 = arith.constant 1 : i32
    %115 = vector.broadcast %c1_i32_31 : i32 to vector<1x256xi32>
    %116 = arith.addi %60, %115 : vector<1x256xi32>
    %c0_i32_32 = arith.constant 0 : i32
    %117 = vector.broadcast %c0_i32_32 : i32 to vector<1x256xi32>
    %118 = arith.cmpi sge, %116, %117 : vector<1x256xi32>
    %c1_i32_33 = arith.constant 1 : i32
    %119 = vector.broadcast %c1_i32_33 : i32 to vector<1x256xi32>
    %120 = arith.addi %60, %119 : vector<1x256xi32>
    %c16_i32_34 = arith.constant 16 : i32
    %121 = vector.broadcast %c16_i32_34 : i32 to vector<1x256xi32>
    %122 = arith.cmpi slt, %120, %121 : vector<1x256xi32>
    %123 = arith.andi %118, %122 : vector<1x256xi1>
    %cst_35 = arith.constant 0.000000e+00 : f32
    %124 = vector.shape_cast %123 : vector<1x256xi1> to vector<1x256xi1>
    %125 = vector.broadcast %124 : vector<1x256xi1> to vector<4x256xi1>
    %126 = vector.broadcast %cst_35 : f32 to vector<4x256xf32>
    %127 = arith.select %125, %114, %126 : vector<4x256xi1>, vector<4x256xf32>
    %128 = arith.addf %94, %127 : vector<4x256xf32>
    %c0_36 = arith.constant 0 : index
    %c0_37 = arith.constant 0 : index
    %c0_38 = arith.constant 0 : index
    %c0_39 = arith.constant 0 : index
    %129 = vector.load %arg5[%c0_36, %c0_37, %c0_38, %c0_39] : memref<1x2x4x256xf32, #tpu.memory_space<vmem>>, vector<1x1x4x256xf32>
    %130 = vector.shape_cast %129 : vector<1x1x4x256xf32> to vector<4x256xf32>
    %131 = vector.shape_cast %128 : vector<4x256xf32> to vector<1x1x4x256xf32>
    tpu.vector_store %arg5[%c0_36, %c0_37, %c0_38, %c0_39], %131 {strides = array<i32>} : memref<1x2x4x256xf32, #tpu.memory_space<vmem>>, vector<1x1x4x256xf32>,
    return
  }
  func.func @transform_0(%arg0: i32, %arg1: i32) -> (i32, i32, i32) {
    %c0_i32 = arith.constant 0 : i32
    %c0_i32_0 = arith.constant 0 : i32
    %c0_i32_1 = arith.constant 0 : i32
    return %arg0, %c0_i32, %c0_i32_0 : i32, i32, i32
  }
  func.func @transform_1(%arg0: i32, %arg1: i32) -> (i32, i32) {
    %c0_i32 = arith.constant 0 : i32
    %c0_i32_0 = arith.constant 0 : i32
    return %arg1, %c0_i32 : i32, i32
  }
  func.func @transform_2(%arg0: i32, %arg1: i32) -> (i32, i32) {
    %c0_i32 = arith.constant 0 : i32
    %c0_i32_0 = arith.constant 0 : i32
    return %arg1, %c0_i32 : i32, i32
  }
  func.func @transform_3(%arg0: i32, %arg1: i32) -> (i32, i32, i32, i32) {
    %c0_i32 = arith.constant 0 : i32
    %c0_i32_0 = arith.constant 0 : i32
    %c0_i32_1 = arith.constant 0 : i32
    return %arg0, %c0_i32, %arg1, %c0_i32_0 : i32, i32, i32, i32
  }
}

</mosaic_0001>

<llo_original>
// kernel: tpu_custom_call.1
$region0: #{tpu_custom_call.1}
  #allocation0 [shape = 'u32[]', space=smem, size = 0x4, offset = 0x4, fixed_abs, tag = 'smem constant byte address 0x4 - core index']
  #allocation1 [shape = 'u32[144,128]{1,0:T(1,128)}', space=vmem, size = 0x12000, scoped, tag = 'internal scratch']
  #allocation2 [shape = 'f32[4,512]{1,0:T(4,128)}', space=vmem, size = 0x2000, scoped, tag = 'scratch operand']
  %s0 = inlined_call_operand.hbm [shape: f32[2,4,256], index: 0, kind: input, shape index: {}]
  %s1 = inlined_call_operand.hbm [shape: f32[4,4], index: 1, kind: input, shape index: {}]
  %s2 = inlined_call_operand.vmem [shape: f32[4,11], index: 2, kind: input, shape index: {}]
  %s3 = inlined_call_operand.hbm [shape: f32[2,2,4,256], index: 3, kind: output, shape index: {}]
  %s4 = sld [smem:[#allocation0]]
  $region53: #{tpu_custom_call.1} parent=0
    _
  %s6 = ssub.s32 1, %s4
  %s7 = scalar_select 0, %s6, %s4
  $region1: #{tpu_custom_call.1} parent=0
    #allocation3 [shape = 'u8[8192]{0}', space=vmem, size = 0x2000, scoped, tag = 'input window, operand 0']
    #allocation4 [shape = 's32[2]{0}', space=sflag, size = 0x8, scoped, tag = 'scoped memory for tpu_custom_call.1']
    #allocation5 [shape = 's32[2]{0}', space=sflag, size = 0x8, scoped, tag = 'scoped memory for tpu_custom_call.1']
    #allocation6 [shape = 'u8[2048]{0}', space=vmem, size = 0x800, scoped, tag = 'input window, operand 1, single buffered']
    #allocation7 [shape = 's32[1]{0}', space=sflag, size = 0x4, scoped, tag = 'scoped memory for tpu_custom_call.1']
    #allocation8 [shape = 'u8[16384]{0}', space=vmem, size = 0x4000, scoped, tag = 'output window, operand 0']
    %8 = vsyncpa [#allocation4], 0
    %s9 = scalar_lea.sflag [#allocation4], 1
    %10 = vsyncpa %s9, 0
    %11 = vsyncpa [#allocation7], 0
    %12 = vsyncpa [#allocation5], 0
    %s13 = scalar_lea.sflag [#allocation5], 1
    %14 = vsyncpa %s13, 0
    loop: start=0, step=1, limit=4
    $region2: #{tpu_custom_call.1} parent=1 // loop_pre_header
      _
    $region3: #{tpu_custom_call.1} parent=1 // loop_header
      %s16 = sphi 0, %s20
      %p17 = scmp.ge.s32.totalorder %s16, 4
      %s23 = sphi 0, %s35
      %s24 = sphi 0, %s31
      %s25 = sphi 0, %s23
      %s26 = sphi 0, %s24
      %s27 = sphi 0, %s25
      %s28 = sphi 0, %s26
      %s38 = sphi 0, %s40
      %s41 = sphi 0, %s38
      %s42 = sphi 0, %s41
      %s58 = sphi 0, %s42
      %s64 = sphi 0, %s66
      %s67 = sphi 0, %s64
      %s68 = sphi 0, %s67
      %s84 = sphi 0, %s68
      %s90 = sphi 0, %s92
      %s93 = sphi 0, %s90
      %s94 = sphi 0, %s93
      %s110 = sphi 0, %s94
      %s118 = sphi 0, %s120
      %s121 = sphi 0, %s118
      %s122 = sphi 0, %s121
      %s138 = sphi 0, %s122
    $region4: #{tpu_custom_call.1} parent=1 // loop_header_branch
      %19 = sbr.rel (%p17) target = $region8
    $region5: #{tpu_custom_call.1} parent=1 // loop_body
      %s21 = ssub.s32 %s16, 1
      %s22 = ssub.s32 %s16, 2
      %s29 = sadd.s32 1, %s24
      %p30 = scmp.ge.s32.totalorder %s29, 1
      %s31 = scalar_select %p30, 0, %s29
      %s32 = sadd.s32 1, %s23
      %s33 = scalar_select %p30, %s32, %s23
      %p34 = scmp.ge.s32.totalorder %s33, 2
      %s35 = scalar_select %p34, 0, %s33
      %s36 = ssub.s32 %s23, %s35
      %p37 = scmp.eq.s32.totalorder %s36, 0
      %s39 = sadd.s32 %s38, 1
      %s40 = scalar_select %p37, %s38, %s39
      %p43 = pneg %p37
      %p44 = scmp.eq.s32.totalorder %s16, 1
      %p45 = por %p43, %p44
      %p46 = scmp.ne.s32.totalorder %s38, %s41
      %p47 = scmp.eq.s32.totalorder %s16, 0
      %p48 = por %p46, %p47
      %p49 = scmp.ne.s32.totalorder %s38, %s41
      %p50 = scmp.eq.s32.totalorder %s21, 1
      %p51 = por %p49, %p50
      %p52 = scmp.ne.s32.totalorder %s41, %s42
      %p53 = scmp.eq.s32.totalorder %s21, 0
      %p54 = por %p52, %p53
      %p55 = scmp.ne.s32.totalorder %s41, %s42
      %p56 = scmp.eq.s32.totalorder %s22, 1
      %p57 = por %p55, %p56
      %p59 = scmp.ne.s32.totalorder %s42, %s58
      %p60 = scmp.eq.s32.totalorder %s22, 0
      %p61 = por %p59, %p60
      %s62 = ssub.s32 %s24, %s31
      %p63 = scmp.eq.s32.totalorder %s62, 0
      %s65 = sadd.s32 %s64, 1
      %s66 = scalar_select %p63, %s64, %s65
      %p69 = pneg %p63
      %p70 = scmp.eq.s32.totalorder %s16, 1
      %p71 = por %p69, %p70
      %p72 = scmp.ne.s32.totalorder %s64, %s67
      %p73 = scmp.eq.s32.totalorder %s16, 0
      %p74 = por %p72, %p73
      %p75 = scmp.ne.s32.totalorder %s64, %s67
      %p76 = scmp.eq.s32.totalorder %s21, 1
      %p77 = por %p75, %p76
      %p78 = scmp.ne.s32.totalorder %s67, %s68
      %p79 = scmp.eq.s32.totalorder %s21, 0
      %p80 = por %p78, %p79
      %p81 = scmp.ne.s32.totalorder %s67, %s68
      %p82 = scmp.eq.s32.totalorder %s22, 1
      %p83 = por %p81, %p82
      %p85 = scmp.ne.s32.totalorder %s68, %s84
      %p86 = scmp.eq.s32.totalorder %s22, 0
      %p87 = por %p85, %p86
      %s88 = ssub.s32 %s24, %s31
      %p89 = scmp.eq.s32.totalorder %s88, 0
      %s91 = sadd.s32 %s90, 1
      %s92 = scalar_select %p89, %s90, %s91
      %p95 = pneg %p89
      %p96 = scmp.eq.s32.totalorder %s16, 1
      %p97 = por %p95, %p96
      %p98 = scmp.ne.s32.totalorder %s90, %s93
      %p99 = scmp.eq.s32.totalorder %s16, 0
      %p100 = por %p98, %p99
      %p101 = scmp.ne.s32.totalorder %s90, %s93
      %p102 = scmp.eq.s32.totalorder %s21, 1
      %p103 = por %p101, %p102
      %p104 = scmp.ne.s32.totalorder %s93, %s94
      %p105 = scmp.eq.s32.totalorder %s21, 0
      %p106 = por %p104, %p105
      %p107 = scmp.ne.s32.totalorder %s93, %s94
      %p108 = scmp.eq.s32.totalorder %s22, 1
      %p109 = por %p107, %p108
      %p111 = scmp.ne.s32.totalorder %s94, %s110
      %p112 = scmp.eq.s32.totalorder %s22, 0
      %p113 = por %p111, %p112
      %s114 = ssub.s32 %s23, %s35
      %s115 = ssub.s32 %s24, %s31
      %s116 = sor.u32 %s114, %s115
      %p117 = scmp.eq.s32.totalorder %s116, 0
      %s119 = sadd.s32 %s118, 1
      %s120 = scalar_select %p117, %s118, %s119
      %p123 = pneg %p117
      %p124 = scmp.eq.s32.totalorder %s16, 1
      %p125 = por %p123, %p124
      %p126 = scmp.ne.s32.totalorder %s118, %s121
      %p127 = scmp.eq.s32.totalorder %s16, 0
      %p128 = por %p126, %p127
      %p129 = scmp.ne.s32.totalorder %s118, %s121
      %p130 = scmp.eq.s32.totalorder %s21, 1
      %p131 = por %p129, %p130
      %p132 = scmp.ne.s32.totalorder %s121, %s122
      %p133 = scmp.eq.s32.totalorder %s21, 0
      %p134 = por %p132, %p133
      %p135 = scmp.ne.s32.totalorder %s121, %s122
      %p136 = scmp.eq.s32.totalorder %s22, 1
      %p137 = por %p135, %p136
      %p139 = scmp.ne.s32.totalorder %s122, %s138
      %p140 = scmp.eq.s32.totalorder %s22, 0
      %p141 = por %p139, %p140
      %p142 = scmp.le.s32.totalorder 1, %s16
      %p143 = scmp.lt.s32.totalorder %s16, 3
      %p144 = pnand %p142, %p143
      %p145 = pneg %p144
      // Predicated region
      $region9: #{tpu_custom_call.1} parent=5 // pred_check
        _
      $region10: #{tpu_custom_call.1} parent=5 // pred_check_branch
        %147 = sbr.rel (%p144) target = $region12
      $region11: #{tpu_custom_call.1} parent=5 // pred_region
        %s148 = ssub.s32 %s16, 1
        // Predicated region
        $region13: #{tpu_custom_call.1} parent=11 // pred_check
          %p149 = pneg %p80
        $region14: #{tpu_custom_call.1} parent=11 // pred_check_branch
          %151 = sbr.rel (%p149) target = $region16
        $region15: #{tpu_custom_call.1} parent=11 // pred_region
          %s153 = ssub.s32 64, 64
          %154 = vsyncadd [#allocation7], %s153
          %s155 = smul.addr %s26, 64
          %s156 = scalar_lea.hbm %s1, %s155
          %s158 = sshll.u32 [#allocation6], 4
          %s159 = int_to_ptr.vmem [resolvable:$true] %s158
          %161 = dma.hbm_to_vmem [thread:$0]  %s156, 64, %s159, [#allocation7]
        $region16: #{tpu_custom_call.1} parent=11 // pred_fallthru
          _
        // Predicated region
        $region17: #{tpu_custom_call.1} parent=11 // pred_check
          %p162 = pneg %p106
        $region18: #{tpu_custom_call.1} parent=11 // pred_check_branch
          %164 = sbr.rel (%p162) target = $region20
        $region19: #{tpu_custom_call.1} parent=11 // pred_region
          %p165 = scmp.lt.s32.totalorder %s26, 0
          %s166 = scalar_select %p165, %s26, 0
          %s167 = smul.addr %s166, 4
          %s168 = scalar_lea.vmem %s2, %s167
        $region20: #{tpu_custom_call.1} parent=11 // pred_fallthru
          _
      $region12: #{tpu_custom_call.1} parent=5 // pred_fallthru
        _
      %p169 = scmp.lt.s32.totalorder %s16, 2
      // Predicated region
      $region21: #{tpu_custom_call.1} parent=5 // pred_check
        %p170 = pneg %p169
      $region22: #{tpu_custom_call.1} parent=5 // pred_check_branch
        %172 = sbr.rel (%p170) target = $region24
      $region23: #{tpu_custom_call.1} parent=5 // pred_region
        // Predicated region
        $region25: #{tpu_custom_call.1} parent=23 // pred_check
          %p173 = pneg %p48
        $region26: #{tpu_custom_call.1} parent=23 // pred_check_branch
          %175 = sbr.rel (%p173) target = $region28
        $region27: #{tpu_custom_call.1} parent=23 // pred_region
          %s176 = sand.u32 %s38, 1
          %s177 = scalar_lea.sflag [#allocation4], %s176
          %s178 = sand.u32 %s38, 1
          %s179 = smul.addr %s178, 8
          %s180 = scalar_lea.vmem [#allocation3], %s179
          %s182 = ssub.s32 128, 128
          %183 = vsyncadd %s177, %s182
          %s184 = smul.addr %s23, 2
          %s185 = smul.addr %s184, 64
          %s186 = scalar_lea.hbm %s0, %s185
          %s188 = sshll.u32 %s180, 4
          %s189 = int_to_ptr.vmem [resolvable:$true] %s188
          %191 = dma.hbm_to_vmem [thread:$0]  %s186, 128, %s189, %s177
        $region28: #{tpu_custom_call.1} parent=23 // pred_fallthru
          _
      $region24: #{tpu_custom_call.1} parent=5 // pred_fallthru
        _
      %p192 = scmp.le.s32.totalorder 1, %s16
      %p193 = scmp.lt.s32.totalorder %s16, 3
      %p194 = pnand %p192, %p193
      %p195 = pneg %p194
      // Predicated region
      $region29: #{tpu_custom_call.1} parent=5 // pred_check
        _
      $region30: #{tpu_custom_call.1} parent=5 // pred_check_branch
        %197 = sbr.rel (%p194) target = $region32
      $region31: #{tpu_custom_call.1} parent=5 // pred_region
        %s198 = ssub.s32 %s16, 1
        %s199 = sand.u32 %s41, 1
        %s200 = scalar_lea.sflag [#allocation4], %s199
        %s201 = sand.u32 %s41, 1
        %s202 = smul.addr %s201, 8
        %s203 = scalar_lea.vmem [#allocation3], %s202
        // Predicated region
        $region33: #{tpu_custom_call.1} parent=31 // pred_check
          %p204 = pneg %p54
        $region34: #{tpu_custom_call.1} parent=31 // pred_check_branch
          %206 = sbr.rel (%p204) target = $region36
        $region35: #{tpu_custom_call.1} parent=31 // pred_region
          %207 = dma.done %s200, 128
        $region36: #{tpu_custom_call.1} parent=31 // pred_fallthru
          _
        // Predicated region
        $region37: #{tpu_custom_call.1} parent=31 // pred_check
          %p208 = pneg %p80
        $region38: #{tpu_custom_call.1} parent=31 // pred_check_branch
          %210 = sbr.rel (%p208) target = $region40
        $region39: #{tpu_custom_call.1} parent=31 // pred_region
          %211 = dma.done [#allocation7], 64
        $region40: #{tpu_custom_call.1} parent=31 // pred_fallthru
          _
        %s212 = sand.u32 %s41, 1
        %s213 = scalar_lea.sflag [#allocation4], %s212
        %s214 = sand.u32 %s41, 1
        %s215 = smul.addr %s214, 8
        %s216 = scalar_lea.vmem [#allocation3], %s215
        %p217 = pneg %p54
        %p218 = pneg %p51
        %p219 = pneg %p80
        %p220 = pneg %p77
        %p221 = scmp.lt.s32.totalorder %s26, 0
        %s222 = scalar_select %p221, %s26, 0
        %s223 = smul.addr %s222, 4
        %s224 = scalar_lea.vmem %s2, %s223
        %p225 = pneg %p106
        %p226 = pneg %p103
        %p227 = pneg %p134
        %p228 = pneg %p131
        %s229 = sand.u32 %s121, 1
        %s230 = scalar_lea.sflag [#allocation5], %s229
        %s231 = sand.u32 %s121, 1
        %s232 = smul.addr %s231, 16
        %s233 = scalar_lea.vmem [#allocation8], %s232
        %p234 = scmp.lt.s32.totalorder %s26, 0
        %s235 = scalar_select %p234, %s26, 0
        %s236 = smul.addr %s235, 4
        %s237 = scalar_lea.vmem %s2, %s236
        %238 = vst [vmem:[#allocation2] sm:$0xf] 0.0
        %v239 = vld [vmem:[%s237] sm:$0xf]
        %v240 = vld [vmem:[#allocation6] sm:$0xf]
        %v241 = vld [vmem:[%s203] sm:$0xff]
        %243 = vset.pattern.permute.xlu0 10
        %244 = vperm.xlu0 %243, %v239
        %v245 = vpop.permute.xlu0 %244
        %v248 = vcombine.high %v241, %v241
        %vm249 = vcmask 31744
        %v251 = vsel %vm249, %v240, 0
        %vm253 = vcmask 1043456
        %v254 = vsel %vm253, %v241, 0
        %v256 = vsel %vm253, %v248, 0
        %258 = vmatprep.subr.mxu0 %v256
        %259 = vmatpush1.msra.mxu0 %v254
        %260 = vmatprep.subr.mxu0 0.0
        %261 = vmatpush1.msra.mxu0 0.0
        %262 = vmatprep.subr.mxu0 0.0
        %263 = vmatpush1.msra.mxu0 0.0
        %264 = vmatprep.subr.mxu0 0.0
        %265 = vmatpush1.msra.mxu0 0.0
        %266 = vmatprep.subr.mxu0 0.0
        %267 = vmatpush1.msra.mxu0 0.0
        %268 = vmatprep.subr.mxu0 0.0
        %269 = vmatpush1.msra.mxu0 0.0
        %270 = vmatprep.subr.mxu0 0.0
        %271 = vmatpush1.msra.mxu0 0.0
        %272 = vmatprep.subr.mxu0 0.0
        %273 = vmatpush1.msra.mxu0 0.0
        %274 = vmatprep.subr.mxu0 0.0
        %275 = vmatpush1.msra.mxu0 0.0
        %276 = vmatprep.subr.mxu0 0.0
        %277 = vmatpush1.msra.mxu0 0.0
        %278 = vmatprep.subr.mxu0 0.0
        %279 = vmatpush1.msra.mxu0 0.0
        %280 = vmatprep.subr.mxu0 0.0
        %281 = vmatpush1.msra.mxu0 0.0
        %282 = vmatprep.subr.mxu0 0.0
        %283 = vmatpush1.msra.mxu0 0.0
        %284 = vmatprep.subr.mxu0 0.0
        %285 = vmatpush1.msra.mxu0 0.0
        %286 = vmatprep.subr.mxu0 0.0
        %287 = vmatpush1.msra.mxu0 0.0
        %288 = vmatprep.subr.mxu0 0.0
        %289 = vmatpush1.msra.mxu0 0.0
        %290 = vmatprep.subr.mxu0 0.0
        %291 = vmatpush1.msra.mxu0 0.0
        %292 = vmatprep.subr.mxu0 0.0
        %293 = vmatpush1.msra.mxu0 0.0
        %294 = vmatprep.subr.mxu0 0.0
        %295 = vmatpush1.msra.mxu0 0.0
        %296 = vmatprep.subr.mxu0 0.0
        %297 = vmatpush1.msra.mxu0 0.0
        %298 = vmatprep.subr.mxu0 0.0
        %299 = vmatpush1.msra.mxu0 0.0
        %300 = vmatprep.subr.mxu0 0.0
        %301 = vmatpush1.msra.mxu0 0.0
        %302 = vmatprep.subr.mxu0 0.0
        %303 = vmatpush1.msra.mxu0 0.0
        %304 = vmatprep.subr.mxu0 0.0
        %305 = vmatpush1.msra.mxu0 0.0
        %306 = vmatprep.subr.mxu0 0.0
        %307 = vmatpush1.msra.mxu0 0.0
        %308 = vmatprep.subr.mxu0 0.0
        %309 = vmatpush1.msra.mxu0 0.0
        %310 = vmatprep.subr.mxu0 0.0
        %311 = vmatpush1.msra.mxu0 0.0
        %312 = vmatprep.subr.mxu0 0.0
        %313 = vmatpush1.msra.mxu0 0.0
        %314 = vmatprep.subr.mxu0 0.0
        %315 = vmatpush1.msra.mxu0 0.0
        %316 = vmatprep.subr.mxu0 0.0
        %317 = vmatpush1.msra.mxu0 0.0
        %318 = vmatprep.subr.mxu0 0.0
        %319 = vmatpush1.msra.mxu0 0.0
        %320 = vmatprep.subr.mxu0 0.0
        %321 = vmatpush1.msra.mxu0 0.0
        %322 = vmatprep.mubr.f32.mxu0 0.0
        %323 = vmatmul.mubr.f32.gmra.mrb[0].mxu0 %v251
        %v324 = vpop.f32.mrb[0].mxu0
        %v325 = vadd.f32 %v245, %v324
        %v326 = vpop.f32.mrb[0].mxu0
        %v327 = vadd.f32 %v245, %v326
        %328 = vdwg.mxu0
        %v329 = vmax.f32 %v325, 0.0
        %v330 = vmax.f32 %v327, 0.0
        %v333 = vcombine.low %v329, %v330
        %s335 = scalar_lea.vmem %s233, 8 [#allocation8]
        %336 = vst [vmem:[%s335] sm:$0xff] %v333
        %337 = vst [vmem:[#allocation2 + $0x4] sm:$0xff] %v333
        %338 = vst [vmem:[#allocation2 + $0xc] sm:$0xf] 0.0
        %339 = vset.pattern.permute.xlu0 4
        %340 = vperm.xlu0 %339, %v239
        %v341 = vpop.permute.xlu0 %340
        %v343 = vmul.f32 %v329, %v341
        %v344 = vmul.f32 %v330, %v341
        %345 = vset.pattern.permute.xlu0 9
        %346 = vperm.xlu0 %345, %v239
        %v347 = vpop.permute.xlu0 %346
        %v349 = vadd.f32 %v343, %v347
        %v350 = vadd.f32 %v344, %v347
        %v351 = vld [vmem:[#allocation2] sm:$0xff]
        %v352 = vld [vmem:[#allocation2 + $0x8] sm:$0xf]
        %353 = vset.pattern.permute.xlu0 1
        %354 = vperm.xlu0 %353, %v239
        %v355 = vpop.permute.xlu0 %354
        %v357 = vunpack.c.l.s4 839922192
        %v358 = vunpack.c.0.s8 %v357
        %v359 = vlaneseq
        %v360 = vshrl.u32 %v359, 7
        %v361 = vsub.s32 %v358, %v360
        %v362 = vrot.slane %v355, %v361
        %v364 = vmul.f32 %v351, %v362
        %v365 = vmul.f32 %v352, %v362
        %v368 = vcombine.high %v364, %v364
        %369 = vrot.lane.b32.xlu0 %v364, 16
        %v370 = vpop.permute.xlu0 %369
        %371 = vrot.lane.b32.xlu0 %v368, 16
        %v372 = vpop.permute.xlu0 %371
        %373 = vrot.lane.b32.xlu0 %v365, 16
        %v374 = vpop.permute.xlu0 %373
        %vm375 = vcmask 130048
        %v376 = vsel %vm375, %v370, %v372
        %v377 = vsel %vm375, %v372, %v374
        %v380 = vadd.f32 %v349, %v376
        %v381 = vadd.f32 %v350, %v377
        %v382 = vld [vmem:[#allocation2 + $0x4] sm:$0xff]
        %v383 = vld [vmem:[#allocation2 + $0xc] sm:$0xf]
        %384 = vset.pattern.permute.xlu0 7
        %385 = vperm.xlu0 %384, %v239
        %v386 = vpop.permute.xlu0 %385
        %v388 = vunpack.c.l.s4 839922192
        %v389 = vunpack.c.0.s8 %v388
        %v390 = vlaneseq
        %v391 = vshrl.u32 %v390, 7
        %v392 = vsub.s32 %v389, %v391
        %v393 = vrot.slane %v386, %v392
        %v395 = vmul.f32 %v382, %v393
        %v396 = vmul.f32 %v383, %v393
        %v399 = vcombine.high %v395, %v395
        %400 = vrot.lane.b32.xlu0 %v395, 112
        %v401 = vpop.permute.xlu0 %400
        %402 = vrot.lane.b32.xlu0 %v399, 112
        %v403 = vpop.permute.xlu0 %402
        %404 = vrot.lane.b32.xlu0 %v396, 112
        %v405 = vpop.permute.xlu0 %404
        %vm406 = vcmask 916480
        %v407 = vsel %vm406, %v401, %v403
        %v408 = vsel %vm406, %v403, %v405
        %v411 = vadd.f32 %v380, %v407
        %v412 = vadd.f32 %v381, %v408
        %v413 = vlaneseq
        %v414 = vand.u32 %v413, 127
        %v415 = vadd.s32 %v414, 128
        %vm416 = vcmp.lt.s32.totalorder %v414, 0
        %v417 = vsub.s32 0, %v414
        %v418 = vsel %vm416, %v417, %v414
        %v419 = vshrl.u32 %v418, 4
        %v420 = vand.u32 %v418, 15
        %v421 = vsub.s32 0, %v420
        %v422 = vsel %vm416, %v421, %v420
        %vm423 = vcmp.lt.s32.totalorder %v415, 0
        %v424 = vsub.s32 0, %v415
        %v425 = vsel %vm423, %v424, %v415
        %v426 = vshrl.u32 %v425, 4
        %v427 = vand.u32 %v425, 15
        %v428 = vsub.s32 0, %v427
        %v429 = vsel %vm423, %v428, %v427
        %vm430 = vcmp.ne.s32.totalorder %v422, 0
        %vm431 = vcmp.ne.s32.totalorder %v429, 0
        %vm432 = vcmp.lt.s32.totalorder %v422, 0
        %vm433 = vcmp.lt.s32.totalorder %v429, 0
        %vm434 = vmand %vm432, %vm430
        %vm435 = vmand %vm433, %vm431
        %v436 = vadd.s32 %v422, 16
        %v437 = vadd.s32 %v429, 16
        %v438 = vsel %vm434, %v436, %v422
        %v439 = vsel %vm435, %v437, %v429
        %v440 = vld [vmem:[#allocation2] sm:$0xff]
        %v441 = vld [vmem:[#allocation2 + $0x8] sm:$0xf]
        %442 = vset.pattern.permute.xlu0 0
        %443 = vperm.xlu0 %442, %v239
        %v444 = vpop.permute.xlu0 %443
        %v446 = vunpack.c.l.s4 839922192
        %v447 = vunpack.c.0.s8 %v446
        %v448 = vlaneseq
        %v449 = vshrl.u32 %v448, 7
        %v450 = vsub.s32 %v447, %v449
        %v451 = vrot.slane %v444, %v450
        %v453 = vmul.f32 %v440, %v451
        %v454 = vmul.f32 %v441, %v451
        %455 = vset.pattern.permute.xlu0 3
        %456 = vperm.xlu0 %455, %v239
        %v457 = vpop.permute.xlu0 %456
        %v459 = vunpack.c.l.s4 839922192
        %v460 = vunpack.c.0.s8 %v459
        %v461 = vlaneseq
        %v462 = vshrl.u32 %v461, 7
        %v463 = vsub.s32 %v460, %v462
        %v464 = vrot.slane %v457, %v463
        %v466 = vmul.f32 %v440, %v464
        %v467 = vmul.f32 %v441, %v464
        %470 = vrot.lane.b32.xlu0 %v466, 112
        %v471 = vpop.permute.xlu0 %470
        %472 = vrot.lane.b32.xlu0 %v467, 112
        %v473 = vpop.permute.xlu0 %472
        %v474 = vrot.slane %v471, 4
        %v475 = vrot.slane %v473, 4
        %v476 = vsel %vm253, %v474, %v475
        %v477 = vsel %vm406, %v471, %v476
        %v480 = vadd.f32 %v453, %v477
        %v481 = vadd.f32 %v454, %v473
        %v482 = vld [vmem:[#allocation2 + $0x4] sm:$0xff]
        %v483 = vld [vmem:[#allocation2 + $0xc] sm:$0xf]
        %484 = vset.pattern.permute.xlu0 6
        %485 = vperm.xlu0 %484, %v239
        %v486 = vpop.permute.xlu0 %485
        %v488 = vunpack.c.l.s4 839922192
        %v489 = vunpack.c.0.s8 %v488
        %v490 = vlaneseq
        %v491 = vshrl.u32 %v490, 7
        %v492 = vsub.s32 %v489, %v491
        %v493 = vrot.slane %v486, %v492
        %v495 = vmul.f32 %v482, %v493
        %v496 = vmul.f32 %v483, %v493
        %499 = vrot.lane.b32.xlu0 %v495, 96
        %v500 = vpop.permute.xlu0 %499
        %501 = vrot.lane.b32.xlu0 %v496, 96
        %v502 = vpop.permute.xlu0 %501
        %v503 = vrot.slane %v500, 4
        %vm504 = vcmask 785408
        %v505 = vsel %vm504, %v503, %v500
        %v506 = vsel %vm504, %v503, %v502
        %v509 = vadd.f32 %v480, %v505
        %v510 = vadd.f32 %v481, %v506
        %v511 = vadd.s32 %v438, 4294967295
        %v512 = vadd.s32 %v439, 4294967295
        %vm513 = vcmp.ge.s32.totalorder %v511, 0
        %vm514 = vcmp.ge.s32.totalorder %v512, 0
        %vm515 = vcmp.lt.s32.totalorder %v511, 16
        %vm516 = vcmp.lt.s32.totalorder %v512, 16
        %vm517 = vmand %vm513, %vm515
        %vm518 = vmand %vm514, %vm516
        %v519 = vsel %vm517, 1, 0
        %v520 = vsel %vm518, 1, 0
        %vm521 = vcmp.eq.s32.totalorder %v519, 1
        %vm522 = vcmp.eq.s32.totalorder %v520, 1
        %v525 = vcombine.high %v509, %v509
        %526 = vrot.lane.b32.xlu0 %v509, 17
        %v527 = vpop.permute.xlu0 %526
        %528 = vrot.lane.b32.xlu0 %v525, 17
        %v529 = vpop.permute.xlu0 %528
        %530 = vrot.lane.b32.xlu0 %v510, 17
        %v531 = vpop.permute.xlu0 %530
        %vm532 = vcmask 138240
        %v533 = vsel %vm532, %v527, %v529
        %v534 = vsel %vm532, %v529, %v531
        %v537 = vsel %vm521, %v533, 0.0
        %v538 = vsel %vm522, %v534, 0.0
        %v539 = vadd.f32 %v411, %v537
        %v540 = vadd.f32 %v412, %v538
        %v541 = vld [vmem:[#allocation2] sm:$0xff]
        %v542 = vld [vmem:[#allocation2 + $0x8] sm:$0xf]
        %543 = vset.pattern.permute.xlu0 2
        %544 = vperm.xlu0 %543, %v239
        %v545 = vpop.permute.xlu0 %544
        %v547 = vunpack.c.l.s4 839922192
        %v548 = vunpack.c.0.s8 %v547
        %v549 = vlaneseq
        %v550 = vshrl.u32 %v549, 7
        %v551 = vsub.s32 %v548, %v550
        %v552 = vrot.slane %v545, %v551
        %v554 = vmul.f32 %v541, %v552
        %v555 = vmul.f32 %v542, %v552
        %v556 = vld [vmem:[#allocation2 + $0x4] sm:$0xff]
        %v557 = vld [vmem:[#allocation2 + $0xc] sm:$0xf]
        %558 = vset.pattern.permute.xlu0 5
        %559 = vperm.xlu0 %558, %v239
        %v560 = vpop.permute.xlu0 %559
        %v562 = vunpack.c.l.s4 839922192
        %v563 = vunpack.c.0.s8 %v562
        %v564 = vlaneseq
        %v565 = vshrl.u32 %v564, 7
        %v566 = vsub.s32 %v563, %v565
        %v567 = vrot.slane %v560, %v566
        %v569 = vmul.f32 %v556, %v567
        %v570 = vmul.f32 %v557, %v567
        %573 = vrot.lane.b32.xlu0 %v569, 112
        %v574 = vpop.permute.xlu0 %573
        %575 = vrot.lane.b32.xlu0 %v570, 112
        %v576 = vpop.permute.xlu0 %575
        %v577 = vrot.slane %v574, 4
        %v578 = vsel %vm406, %v577, %v574
        %v579 = vsel %vm406, %v577, %v576
        %v582 = vadd.f32 %v554, %v578
        %v583 = vadd.f32 %v555, %v579
        %584 = vset.pattern.permute.xlu0 8
        %585 = vperm.xlu0 %584, %v239
        %v586 = vpop.permute.xlu0 %585
        %v588 = vunpack.c.l.s4 839922192
        %v589 = vunpack.c.0.s8 %v588
        %v590 = vlaneseq
        %v591 = vshrl.u32 %v590, 7
        %v592 = vsub.s32 %v589, %v591
        %v593 = vrot.slane %v586, %v592
        %v595 = vmul.f32 %v556, %v593
        %v596 = vmul.f32 %v557, %v593
        %599 = vrot.lane.b32.xlu0 %v595, 96
        %v600 = vpop.permute.xlu0 %599
        %601 = vrot.lane.b32.xlu0 %v596, 96
        %v602 = vpop.permute.xlu0 %601
        %v603 = vrot.slane %v600, 4
        %v604 = vsel %vm504, %v603, %v600
        %v605 = vsel %vm504, %v603, %v602
        %v608 = vadd.f32 %v582, %v604
        %v609 = vadd.f32 %v583, %v605
        %v610 = vadd.s32 %v438, 1
        %v611 = vadd.s32 %v439, 1
        %vm612 = vcmp.ge.s32.totalorder %v610, 0
        %vm613 = vcmp.ge.s32.totalorder %v611, 0
        %vm614 = vcmp.lt.s32.totalorder %v610, 16
        %vm615 = vcmp.lt.s32.totalorder %v611, 16
        %vm616 = vmand %vm612, %vm614
        %vm617 = vmand %vm613, %vm615
        %v618 = vsel %vm616, 1, 0
        %v619 = vsel %vm617, 1, 0
        %vm620 = vcmp.eq.s32.totalorder %v618, 1
        %vm621 = vcmp.eq.s32.totalorder %v619, 1
        %v624 = vcombine.high %v608, %v608
        %625 = vrot.lane.b32.xlu0 %v608, 15
        %v626 = vpop.permute.xlu0 %625
        %627 = vrot.lane.b32.xlu0 %v624, 15
        %v628 = vpop.permute.xlu0 %627
        %629 = vrot.lane.b32.xlu0 %v609, 15
        %v630 = vpop.permute.xlu0 %629
        %vm631 = vcmask 121856
        %v632 = vsel %vm631, %v626, %v628
        %v633 = vsel %vm631, %v628, %v630
        %v636 = vsel %vm620, %v632, 0.0
        %v637 = vsel %vm621, %v633, 0.0
        %v638 = vadd.f32 %v539, %v636
        %v639 = vadd.f32 %v540, %v637
        %v642 = vcombine.low %v638, %v639
        %644 = vst [vmem:[%s233] sm:$0xff] %v642
        %s645 = sand.u32 %s121, 1
        %s646 = scalar_lea.sflag [#allocation5], %s645
        %s647 = sand.u32 %s121, 1
        %s648 = smul.addr %s647, 16
        %s649 = scalar_lea.vmem [#allocation8], %s648
        // Predicated region
        $region41: #{tpu_custom_call.1} parent=31 // pred_check
          %p650 = pneg %p131
        $region42: #{tpu_custom_call.1} parent=31 // pred_check_branch
          %652 = sbr.rel (%p650) target = $region44
        $region43: #{tpu_custom_call.1} parent=31 // pred_region
          %s654 = ssub.s32 256, 256
          %655 = vsyncadd %s646, %s654
          %s656 = smul.addr %s26, 2
          %s657 = smul.addr %s25, 4
          %s658 = sadd.s32 %s656, %s657
          %s659 = smul.addr %s658, 64
          %s660 = scalar_lea.hbm %s3, %s659
          %s661 = sshll.u32 %s649, 4
          %s662 = int_to_ptr.vmem [resolvable:$true] %s661
          %667 = dma.vmem_to_hbm [thread:$0]  %s662, 256, %s660, %s646, 128, 128, 8
        $region44: #{tpu_custom_call.1} parent=31 // pred_fallthru
          _
      $region32: #{tpu_custom_call.1} parent=5 // pred_fallthru
        _
      %p668 = scmp.le.s32.totalorder 2, %s16
      // Predicated region
      $region45: #{tpu_custom_call.1} parent=5 // pred_check
        %p669 = pneg %p668
      $region46: #{tpu_custom_call.1} parent=5 // pred_check_branch
        %671 = sbr.rel (%p669) target = $region48
      $region47: #{tpu_custom_call.1} parent=5 // pred_region
        %s672 = ssub.s32 %s16, 2
        // Predicated region
        $region49: #{tpu_custom_call.1} parent=47 // pred_check
          %p673 = pneg %p137
        $region50: #{tpu_custom_call.1} parent=47 // pred_check_branch
          %675 = sbr.rel (%p673) target = $region52
        $region51: #{tpu_custom_call.1} parent=47 // pred_region
          %s676 = sand.u32 %s122, 1
          %s677 = scalar_lea.sflag [#allocation5], %s676
          %s678 = sand.u32 %s122, 1
          %s679 = smul.addr %s678, 16
          %s680 = scalar_lea.vmem [#allocation8], %s679
          %681 = dma.done %s677, 256
        $region52: #{tpu_custom_call.1} parent=47 // pred_fallthru
          _
      $region48: #{tpu_custom_call.1} parent=5 // pred_fallthru
        _
    $region6: #{tpu_custom_call.1} parent=1 // loop_footer
      %s20 = sadd.s32 1, %s16
    $region7: #{tpu_custom_call.1} parent=1 // loop_footer_branch
      %15 = sbr.rel target = $region3
    $region8: #{tpu_custom_call.1} parent=1 // loop_exit
      _
    %682 = vsyncpa [#allocation4], 1
    %s683 = scalar_lea.sflag [#allocation4], 1
    %684 = vsyncpa %s683, 1
    %685 = vsyncpa [#allocation7], 1
    %686 = vsyncpa [#allocation5], 1
    %s687 = scalar_lea.sflag [#allocation5], 1
    %688 = vsyncpa %s687, 1

</llo_original>
